<compile_context>
chip_gen: v7x
topology: tpu7x:2x2x1
jax: 0.10.0
libtpu: 0.0.40
codegen_flags: <defaults>
</compile_context>

<pallas_src>
import functools
import math

import jax
import jax.numpy as jnp
import numpy as np
from jax.experimental import pallas as pl
from jax.experimental.pallas import tpu as pltpu


# --------------------------------------------------------------------------------------
# helpers
# --------------------------------------------------------------------------------------
def _round_up(x, m):
    return ((x + m - 1) // m) * m


def _vmem_limit_bytes():
    """Generation-aware VMEM budget (~60% of physical capacity, capped)."""
    cap = 64 * 1024 * 1024
    try:
        info = pltpu.get_tpu_info()
        cap = int(getattr(info, "vmem_capacity_bytes", cap)) or cap
    except Exception:
        pass
    return max(24 * 1024 * 1024, min(int(cap * 0.6), 100 * 1024 * 1024))


def _col_tile(dim, target):
    """Largest lane-aligned (multiple-of-128) divisor of dim that is <= target,
    or dim itself if dim <= target / no such divisor exists."""
    if dim <= target:
        return dim
    t = (target // 128) * 128
    while t >= 128:
        if dim % t == 0:
            return t
        t -= 128
    return dim


_ROW_TILES = (512, 384, 256, 192, 128, 96, 64, 48, 32, 24, 16, 8)


def _pick_row_tile(rows, fits, max_tile=512):
    for t in _ROW_TILES:
        if t <= max_tile and t <= rows and rows % t == 0 and fits(t):
            return t
    for t in _ROW_TILES:
        if t <= rows and rows % t == 0:
            return t
    return rows


# --------------------------------------------------------------------------------------
# K1: RMSNorm1 + QKV projection.  Grid (nN, nR): weight columns OUTER (streamed once),
# rows INNER.  RMSNorm recompute per column block is negligible next to the matmuls.
# --------------------------------------------------------------------------------------
def _norm_qkv_kernel(x_ref, nw_ref, wq_ref, wk_ref, wv_ref, bq_ref, bk_ref, bv_ref,
                     q_ref, k_ref, v_ref, *, eps, compute_dtype):
    x = x_ref[...].astype(jnp.float32)                                   # (tR, D)
    var = jnp.mean(x * x, axis=-1, keepdims=True)
    xn = ((x * jax.lax.rsqrt(var + eps))
          * nw_ref[0].astype(jnp.float32)).astype(compute_dtype)
    for w_ref, b_ref, o_ref in ((wq_ref, bq_ref, q_ref),
                                (wk_ref, bk_ref, k_ref),
                                (wv_ref, bv_ref, v_ref)):
        y = jnp.dot(xn, w_ref[...], preferred_element_type=jnp.float32)  # (tR, tN)
        o_ref[...] = (y + b_ref[0].astype(jnp.float32)).astype(o_ref.dtype)


# --------------------------------------------------------------------------------------
# K2: attention.  Full per-head-group K/V resident in VMEM, single-shot softmax per q tile,
# heads packed so the column block is lane-aligned, no transposes anywhere.
# --------------------------------------------------------------------------------------
def _attention_kernel(q_ref, k_ref, v_ref, o_ref, *, scale, s_valid, head_dim,
                      heads_per_block, need_mask, recip_approx, compute_dtype):
    q = q_ref[0]                                                         # (tQ, cW)
    k = k_ref[0]                                                         # (Skv, cW)
    v = v_ref[0]
    kv_len = k.shape[0]
    if need_mask:  # static: only emitted when the sequence was padded
        kpos = jax.lax.broadcasted_iota(jnp.int32, (1, kv_len), 1)
        key_bias = jnp.where(kpos < s_valid, 0.0, -1e30).astype(jnp.float32)
    outs = []
    for h in range(heads_per_block):
        sl = slice(h * head_dim, (h + 1) * head_dim)
        qh = (q[:, sl].astype(jnp.float32) * scale).astype(compute_dtype)
        s = jax.lax.dot_general(qh, k[:, sl], (((1,), (1,)), ((), ())),
                                preferred_element_type=jnp.float32)      # (tQ, Skv)
        if need_mask:
            s = s + key_bias
        m = jnp.max(s, axis=-1, keepdims=True)
        p = jnp.exp(s - m)
        l = jnp.sum(p, axis=-1, keepdims=True)
        o = jnp.dot(p.astype(compute_dtype), v[:, sl],
                    preferred_element_type=jnp.float32)                  # (tQ, hd)
        outs.append(o * pl.reciprocal(l, approx=recip_approx))
    o_ref[0] = jnp.concatenate(outs, axis=-1).astype(o_ref.dtype)


# --------------------------------------------------------------------------------------
# K3: attention out-projection + bias + ls1 layer-scale + residual.
# Grid (nN, nR): wo streamed once; residual / output column-blocked.
# --------------------------------------------------------------------------------------
def _proj_residual_kernel(a_ref, wo_ref, bo_ref, ls_ref, x_ref, o_ref):
    y = jnp.dot(a_ref[...], wo_ref[...], preferred_element_type=jnp.float32)
    y = (y + bo_ref[0].astype(jnp.float32)) * ls_ref[0].astype(jnp.float32)
    o_ref[...] = (x_ref[...].astype(jnp.float32) + y).astype(o_ref.dtype)


# --------------------------------------------------------------------------------------
# K4: RMSNorm2 + fc1 + gelu + fc2 (reduction over I) + bias + ls2 + residual.
# Grid (nR, nI): large row tiles so w1/w2 are re-streamed as few times as possible.
# --------------------------------------------------------------------------------------
def _norm_mlp_residual_kernel(h_ref, nw_ref, w1_ref, b1_ref, w2_ref, b2_ref, ls_ref,
                              o_ref, acc_sc, hn_sc, *, eps, compute_dtype):
    i = pl.program_id(1)

    @pl.when(i == 0)
    def _():
        h = h_ref[...].astype(jnp.float32)
        var = jnp.mean(h * h, axis=-1, keepdims=True)
        hn_sc[...] = ((h * jax.lax.rsqrt(var + eps))
                      * nw_ref[0].astype(jnp.float32)).astype(hn_sc.dtype)
        acc_sc[...] = jnp.zeros(acc_sc.shape, jnp.float32)

    g = jnp.dot(hn_sc[...], w1_ref[...], preferred_element_type=jnp.float32)
    g = jax.nn.gelu(g + b1_ref[0].astype(jnp.float32), approximate=False)   # exact (erf) GELU
    acc_sc[...] += jnp.dot(g.astype(compute_dtype), w2_ref[...],
                           preferred_element_type=jnp.float32)

    @pl.when(i == pl.num_programs(1) - 1)
    def _():
        y = (acc_sc[...] + b2_ref[0].astype(jnp.float32)) * ls_ref[0].astype(jnp.float32)
        o_ref[...] = (h_ref[...].astype(jnp.float32) + y).astype(o_ref.dtype)


# --------------------------------------------------------------------------------------
# Parameter preparation (done ONCE, outside the per-layer call: no per-call weight casts)
# --------------------------------------------------------------------------------------
def prepare_params(raw, compute_dtype=jnp.bfloat16):
    cd = jnp.dtype(compute_dtype)
    D = raw["wqkv"].shape[0]
    wqkv = raw["wqkv"].astype(cd)
    bqkv = raw["bqkv"].astype(jnp.float32)
    return {
        "norm1_w": raw["norm1_w"].astype(jnp.float32),
        "norm2_w": raw["norm2_w"].astype(jnp.float32),
        "wq": wqkv[:, :D], "wk": wqkv[:, D:2 * D], "wv": wqkv[:, 2 * D:],
        "bq": bqkv[:, :D], "bk": bqkv[:, D:2 * D], "bv": bqkv[:, 2 * D:],
        "wo": raw["wo"].astype(cd), "bo": raw["bo"].astype(jnp.float32),
        "ls1": raw["ls1"].astype(jnp.float32), "ls2": raw["ls2"].astype(jnp.float32),
        "w1": raw["w1"].astype(cd), "b1": raw["b1"].astype(jnp.float32),
        "w2": raw["w2"].astype(cd), "b2": raw["b2"].astype(jnp.float32),
    }


# --------------------------------------------------------------------------------------
# Layer wrapper
# --------------------------------------------------------------------------------------
def intern_vision_encoder_layer(x, params, *, num_heads, eps=1e-6,
                                compute_dtype=jnp.bfloat16, h1_dtype=None):
    B, S, D = x.shape
    H = num_heads
    assert D % H == 0
    hd = D // H
    scale = hd ** (-0.5)
    I = params["w1"].shape[1]

    cd = jnp.dtype(compute_dtype)
    h1_dtype = jnp.dtype(h1_dtype) if h1_dtype is not None else x.dtype
    x_b = jnp.dtype(x.dtype).itemsize
    cd_b = cd.itemsize
    h1_b = jnp.dtype(h1_dtype).itemsize
    recip_approx = bool(cd != jnp.dtype(jnp.float32))

    vmem_limit = _vmem_limit_bytes()
    budget = int(vmem_limit * 0.9)

    # ---- sequence padding (per-batch, masked in attention, sliced at the end) -----------
    Sp = _round_up(S, 8) if S <= 128 else _round_up(S, 128)
    x_p = jnp.pad(x, ((0, 0), (0, Sp - S), (0, 0))) if Sp != S else x
    rows = B * Sp
    x_rows = x_p.reshape(rows, D)

    # ---- head grouping for attention (lane-aligned column blocks, packs hd<128 heads) ---
    g = 128 // math.gcd(hd, 128)
    hg = g if (D % 128 == 0 and H % g == 0) else H
    cW = hg * hd                       # multiple of 128, or == D
    n_hgrp = H // hg

    # q tile for attention (big tiles -> few grid steps; Sp is a multiple of tQ)
    if Sp <= 512:
        tQ = Sp
    else:
        tQ = 128
        for t in (512, 384, 256):
            if Sp % t == 0:
                tQ = t
                break
    nSq = Sp // tQ

    # ---- column / row tile selection under the VMEM budget ------------------------------
    tN = None
    for tgt in (1024, 896, 768, 640, 512, 384, 256, 128):
        cand = _col_tile(D, tgt)
        if 3 * 2 * D * cand * cd_b <= budget * 0.7:   # K1 keeps 3 weight blocks, double-buffered
            tN = cand
            break
    if tN is None:
        tN = _col_tile(D, 128)
    nN = D // tN

    def fits_k1(tR):
        return (3 * 2 * D * tN * cd_b + 2 * tR * D * x_b + tR * D * (4 + cd_b)
                + 3 * 2 * tR * tN * cd_b) <= budget
    tR1 = _pick_row_tile(rows, fits_k1, max_tile=512)

    def fits_k3(tR):
        return (2 * D * tN * cd_b + 2 * tR * D * cd_b + 2 * tR * tN * x_b
                + 2 * tR * tN * h1_b + tR * tN * 4) <= budget
    tR3 = _pick_row_tile(rows, fits_k3, max_tile=512)

    def k4_est(tR, tI):
        return (2 * tR * D * h1_b + tR * D * cd_b + tR * D * 4
                + 2 * D * tI * cd_b + 2 * tI * D * cd_b
                + 2 * tR * D * x_b + 2 * tR * tI * 4)

    tR4, tI = None, None
    for t in _ROW_TILES:               # maximize the row tile first: fewest MLP weight passes
        if t > 512 or t > rows or rows % t:
            continue
        for tgt in (1024, 768, 640, 512, 384, 256, 128):
            cand = _col_tile(I, tgt)
            if k4_est(t, cand) <= budget:
                tR4, tI = t, cand
                break
        if tR4 is not None:
            break
    if tR4 is None:
        tR4 = _pick_row_tile(rows, lambda _t: True, max_tile=128)
        tI = _col_tile(I, 128)
    nI = I // tI

    # ---- parameters (already prepared: no per-call casts) --------------------------------
    wq, wk, wv = params["wq"], params["wk"], params["wv"]
    bq, bk, bv = params["bq"], params["bk"], params["bv"]
    wo, bo = params["wo"], params["bo"]
    ls1, ls2 = params["ls1"], params["ls2"]
    n1w, n2w = params["norm1_w"], params["norm2_w"]
    w1, b1 = params["w1"], params["b1"]
    w2, b2 = params["w2"], params["b2"]

    # ---- K1: RMSNorm1 + QKV --------------------------------------------------------------
    qkv_cost = pl.CostEstimate(
        flops=int(2 * rows * D * 3 * D), transcendentals=0,
        bytes_accessed=int(nN * rows * D * x_b + 3 * D * D * cd_b + 3 * rows * D * cd_b))
    q2, k2, v2 = pl.pallas_call(
        functools.partial(_norm_qkv_kernel, eps=eps, compute_dtype=cd),
        grid=(nN, rows // tR1),
        in_specs=[
            pl.BlockSpec((tR1, D), lambda n, r: (r, 0)),     # x rows (full D for the norm)
            pl.BlockSpec((1, D), lambda n, r: (0, 0)),       # norm1 weight
            pl.BlockSpec((D, tN), lambda n, r: (0, n)),      # wq (columns streamed once)
            pl.BlockSpec((D, tN), lambda n, r: (0, n)),      # wk
            pl.BlockSpec((D, tN), lambda n, r: (0, n)),      # wv
            pl.BlockSpec((1, tN), lambda n, r: (0, n)),      # bq
            pl.BlockSpec((1, tN), lambda n, r: (0, n)),      # bk
            pl.BlockSpec((1, tN), lambda n, r: (0, n)),      # bv
        ],
        out_specs=(
            pl.BlockSpec((tR1, tN), lambda n, r: (r, n)),
            pl.BlockSpec((tR1, tN), lambda n, r: (r, n)),
            pl.BlockSpec((tR1, tN), lambda n, r: (r, n)),
        ),
        out_shape=(
            jax.ShapeDtypeStruct((rows, D), cd),
            jax.ShapeDtypeStruct((rows, D), cd),
            jax.ShapeDtypeStruct((rows, D), cd),
        ),
        compiler_params=pltpu.CompilerParams(
            dimension_semantics=("parallel", "parallel"),
            vmem_limit_bytes=vmem_limit),
        cost_estimate=qkv_cost,
    )(x_rows, n1w, wq, wk, wv, bq, bk, bv)

    # ---- K2: attention (free reshapes only; no transposes) --------------------------------
    qh = q2.reshape(B, Sp, D)
    kh = k2.reshape(B, Sp, D)
    vh = v2.reshape(B, Sp, D)

    attn_cost = pl.CostEstimate(
        flops=int(4 * B * H * Sp * Sp * hd),
        transcendentals=int(B * H * Sp * Sp),
        bytes_accessed=int(4 * B * Sp * D * cd_b))
    attn = pl.pallas_call(
        functools.partial(_attention_kernel, scale=scale, s_valid=S, head_dim=hd,
                          heads_per_block=hg, need_mask=(Sp != S),
                          recip_approx=recip_approx, compute_dtype=cd),
        grid=(B, n_hgrp, nSq),
        in_specs=[
            pl.BlockSpec((1, tQ, cW), lambda b, hgi, qi: (b, qi, hgi)),   # q tile
            pl.BlockSpec((1, Sp, cW), lambda b, hgi, qi: (b, 0, hgi)),    # full K (per head grp)
            pl.BlockSpec((1, Sp, cW), lambda b, hgi, qi: (b, 0, hgi)),    # full V
        ],
        out_specs=pl.BlockSpec((1, tQ, cW), lambda b, hgi, qi: (b, qi, hgi)),
        out_shape=jax.ShapeDtypeStruct((B, Sp, D), cd),
        compiler_params=pltpu.CompilerParams(
            dimension_semantics=("parallel", "parallel", "parallel"),
            vmem_limit_bytes=vmem_limit),
        cost_estimate=attn_cost,
    )(qh, kh, vh)
    attn_rows = attn.reshape(rows, D)

    # ---- K3: out-projection + ls1 + residual ----------------------------------------------
    proj_cost = pl.CostEstimate(
        flops=int(2 * rows * D * D), transcendentals=0,
        bytes_accessed=int(nN * rows * D * cd_b + D * D * cd_b + rows * D * (x_b + h1_b)))
    h1 = pl.pallas_call(
        _proj_residual_kernel,
        grid=(nN, rows // tR3),
        in_specs=[
            pl.BlockSpec((tR3, D), lambda n, r: (r, 0)),     # attention output rows
            pl.BlockSpec((D, tN), lambda n, r: (0, n)),      # wo (columns streamed once)
            pl.BlockSpec((1, tN), lambda n, r: (0, n)),      # bo
            pl.BlockSpec((1, tN), lambda n, r: (0, n)),      # ls1
            pl.BlockSpec((tR3, tN), lambda n, r: (r, n)),    # residual x
        ],
        out_specs=pl.BlockSpec((tR3, tN), lambda n, r: (r, n)),
        out_shape=jax.ShapeDtypeStruct((rows, D), h1_dtype),
        compiler_params=pltpu.CompilerParams(
            dimension_semantics=("parallel", "parallel"),
            vmem_limit_bytes=vmem_limit),
        cost_estimate=proj_cost,
    )(attn_rows, wo, bo, ls1, x_rows)

    # ---- K4: RMSNorm2 + MLP (reduction over I) + ls2 + residual ----------------------------
    mlp_cost = pl.CostEstimate(
        flops=int(4 * rows * D * I), transcendentals=int(rows * I),
        bytes_accessed=int(rows * D * (h1_b + x_b) + (rows // tR4) * 2 * D * I * cd_b))
    out_rows = pl.pallas_call(
        functools.partial(_norm_mlp_residual_kernel, eps=eps, compute_dtype=cd),
        grid=(rows // tR4, nI),
        in_specs=[
            pl.BlockSpec((tR4, D), lambda r, i: (r, 0)),     # h1 (residual + norm input)
            pl.BlockSpec((1, D), lambda r, i: (0, 0)),       # norm2 weight
            pl.BlockSpec((D, tI), lambda r, i: (0, i)),      # fc1 weight (streamed over I)
            pl.BlockSpec((1, tI), lambda r, i: (0, i)),      # fc1 bias
            pl.BlockSpec((tI, D), lambda r, i: (i, 0)),      # fc2 weight (streamed over I)
            pl.BlockSpec((1, D), lambda r, i: (0, 0)),       # fc2 bias
            pl.BlockSpec((1, D), lambda r, i: (0, 0)),       # ls2
        ],
        out_specs=pl.BlockSpec((tR4, D), lambda r, i: (r, 0)),
        out_shape=jax.ShapeDtypeStruct((rows, D), x.dtype),
        scratch_shapes=[
            pltpu.VMEM((tR4, D), jnp.float32),   # fc2 accumulator
            pltpu.VMEM((tR4, D), cd),            # cached normalized h1 tile
        ],
        compiler_params=pltpu.CompilerParams(
            dimension_semantics=("parallel", "arbitrary"),
            vmem_limit_bytes=vmem_limit),
        cost_estimate=mlp_cost,
    )(h1, n2w, w1, b1, w2, b2, ls2)

    out = out_rows.reshape(B, Sp, D)
    if Sp != S:
        out = out[:, :S, :]
    return out


# --------------------------------------------------------------------------------------
# Pure-JAX reference (same math, no Pallas) for correctness checking
# --------------------------------------------------------------------------------------
def reference_layer(x, params, *, num_heads, eps=1e-6):
    B, S, D = x.shape
    hd = D // num_heads
    scale = hd ** (-0.5)

    def rms_norm(v, w):
        var = jnp.mean(v * v, axis=-1, keepdims=True)
        return (v * jax.lax.rsqrt(var + eps)) * w

    xn = rms_norm(x, params["norm1_w"][0])
    qkv = xn @ params["wqkv"] + params["bqkv"][0]
    q, k, v = jnp.split(qkv, 3, axis=-1)
    q = q.reshape(B, S, num_heads, hd).transpose(0, 2, 1, 3)
    k = k.reshape(B, S, num_heads, hd).transpose(0, 2, 1, 3)
    v = v.reshape(B, S, num_heads, hd).transpose(0, 2, 1, 3)
    s = jnp.einsum("bhqd,bhkd->bhqk", q, k) * scale
    p = jax.nn.softmax(s, axis=-1)
    a = jnp.einsum("bhqk,bhkd->bhqd", p, v).transpose(0, 2, 1, 3).reshape(B, S, D)
    a = a @ params["wo"] + params["bo"][0]
    h1 = x + a * params["ls1"][0]

    hn = rms_norm(h1, params["norm2_w"][0])
    m = jax.nn.gelu(hn @ params["w1"] + params["b1"][0], approximate=False)
    m = m @ params["w2"] + params["b2"][0]
    return h1 + m * params["ls2"][0]


def _make_params(key, D, I, factor=1.0):
    ks = jax.random.split(key, 8)

    def w(k, shape):
        return jax.random.normal(k, shape, dtype=jnp.float32) * 0.02

    return {
        "norm1_w": jnp.ones((1, D), jnp.float32),
        "wqkv": w(ks[0], (D, 3 * D)),          # (in, out) layout
        "bqkv": w(ks[1], (1, 3 * D)),
        "wo": w(ks[2], (D, D)),
        "bo": w(ks[3], (1, D)),
        "ls1": factor * jnp.ones((1, D), jnp.float32),
        "norm2_w": jnp.ones((1, D), jnp.float32),
        "w1": w(ks[4], (D, I)),
        "b1": w(ks[5], (1, I)),
        "w2": w(ks[6], (I, D)),
        "b2": jnp.zeros((1, D), jnp.float32),
        "ls2": factor * jnp.ones((1, D), jnp.float32),
    }


if __name__ == "__main__":
    key = jax.random.PRNGKey(0)
    k_x1, k_p1, k_x2, k_p2 = jax.random.split(key, 4)
    eps = 1e-6

    # ---- Config 1: tiny sanity config from the module -----------------------------------
    B1, S1, D1, H1, I1 = 2, 8, 32, 4, 64
    x1 = jax.random.normal(k_x1, (B1, S1, D1), dtype=jnp.float32)
    raw1 = _make_params(k_p1, D1, I1)
    ref1 = reference_layer(x1, raw1, num_heads=H1, eps=eps)

    out1_f32 = intern_vision_encoder_layer(
        x1, prepare_params(raw1, jnp.float32), num_heads=H1, eps=eps,
        compute_dtype=jnp.float32)
    out1_f32 = jax.block_until_ready(out1_f32)
    np.testing.assert_allclose(np.asarray(out1_f32), np.asarray(ref1), rtol=2e-3, atol=2e-3)

    out1_bf16 = intern_vision_encoder_layer(
        x1, prepare_params(raw1, jnp.bfloat16), num_heads=H1, eps=eps,
        compute_dtype=jnp.bfloat16)
    out1_bf16 = jax.block_until_ready(out1_bf16)
    np.testing.assert_allclose(np.asarray(out1_bf16), np.asarray(ref1), rtol=5e-2, atol=5e-2)

    # ---- Config 2: exercises streamed columns (nN>1), I-accumulation (nI>1), sequence
    # padding + key masking and multi-row tiling (exact f32 math, tight tolerance).
    B2, S2, D2, H2, I2 = 2, 136, 896, 7, 1792
    x2 = jax.random.normal(k_x2, (B2, S2, D2), dtype=jnp.float32)
    raw2 = _make_params(k_p2, D2, I2)
    ref2 = reference_layer(x2, raw2, num_heads=H2, eps=eps)

    out2_f32 = intern_vision_encoder_layer(
        x2, prepare_params(raw2, jnp.float32), num_heads=H2, eps=eps,
        compute_dtype=jnp.float32)
    out2_f32 = jax.block_until_ready(out2_f32)
    np.testing.assert_allclose(np.asarray(out2_f32), np.asarray(ref2), rtol=2e-3, atol=2e-3)

    print("KERNEL_OK")
</pallas_src>

<mosaic_0001>
module attributes {stable_mosaic.version = 11 : i64} {
  func.func @_norm_qkv_kernel(%arg0: i32, %arg1: i32, %arg2: memref<16x32xf32, #tpu.memory_space<vmem>>, %arg3: memref<1x32xf32, #tpu.memory_space<vmem>>, %arg4: memref<32x32xf32, #tpu.memory_space<vmem>>, %arg5: memref<32x32xf32, #tpu.memory_space<vmem>>, %arg6: memref<32x32xf32, #tpu.memory_space<vmem>>, %arg7: memref<1x32xf32, #tpu.memory_space<vmem>>, %arg8: memref<1x32xf32, #tpu.memory_space<vmem>>, %arg9: memref<1x32xf32, #tpu.memory_space<vmem>>, %arg10: memref<16x32xf32, #tpu.memory_space<vmem>>, %arg11: memref<16x32xf32, #tpu.memory_space<vmem>>, %arg12: memref<16x32xf32, #tpu.memory_space<vmem>>) attributes {dimension_semantics = [#tpu.dimension_semantics<parallel>, #tpu.dimension_semantics<parallel>], iteration_bounds = array<i64: 1, 1>, scalar_prefetch = 0 : i64, scratch_operands = 0 : i64, tpu.core_type = #tpu.core_type<tc>, window_params = [{transform_indices = @transform_0, window_bounds = array<i64: 16, 32>}, {pipeline_mode = #tpu.pipeline_mode<synchronous>, transform_indices = @transform_1, window_bounds = array<i64: 1, 32>}, {transform_indices = @transform_2, window_bounds = array<i64: 32, 32>}, {transform_indices = @transform_3, window_bounds = array<i64: 32, 32>}, {transform_indices = @transform_4, window_bounds = array<i64: 32, 32>}, {transform_indices = @transform_5, window_bounds = array<i64: 1, 32>}, {transform_indices = @transform_6, window_bounds = array<i64: 1, 32>}, {transform_indices = @transform_7, window_bounds = array<i64: 1, 32>}, {transform_indices = @transform_8, window_bounds = array<i64: 16, 32>}, {transform_indices = @transform_9, window_bounds = array<i64: 16, 32>}, {transform_indices = @transform_10, window_bounds = array<i64: 16, 32>}]} {
    %c0 = arith.constant 0 : index
    %c0_0 = arith.constant 0 : index
    %0 = vector.load %arg2[%c0, %c0_0] : memref<16x32xf32, #tpu.memory_space<vmem>>, vector<16x32xf32>
    %1 = arith.mulf %0, %0 : vector<16x32xf32>
    %cst = arith.constant dense<0.000000e+00> : vector<16xf32>
    %2 = vector.multi_reduction <add>, %1, %cst [1] : vector<16x32xf32> to vector<16xf32>
    %3 = vector.shape_cast %2 : vector<16xf32> to vector<16x1xf32>
    %cst_1 = arith.constant 3.200000e+01 : f32
    %4 = vector.broadcast %cst_1 : f32 to vector<16x1xf32>
    %5 = arith.divf %3, %4 : vector<16x1xf32>
    %cst_2 = arith.constant 9.99999997E-7 : f32
    %6 = vector.broadcast %cst_2 : f32 to vector<16x1xf32>
    %7 = arith.addf %5, %6 : vector<16x1xf32>
    %8 = math.rsqrt %7 : vector<16x1xf32>
    %9 = vector.broadcast %8 : vector<16x1xf32> to vector<16x32xf32>
    %10 = arith.mulf %0, %9 : vector<16x32xf32>
    %c0_3 = arith.constant 0 : index
    %c0_4 = arith.constant 0 : index
    %11 = vector.load %arg3[%c0_3, %c0_4] : memref<1x32xf32, #tpu.memory_space<vmem>>, vector<1x32xf32>
    %12 = vector.shape_cast %11 : vector<1x32xf32> to vector<32xf32>
    %13 = vector.shape_cast %12 : vector<32xf32> to vector<1x32xf32>
    %14 = vector.broadcast %13 : vector<1x32xf32> to vector<16x32xf32>
    %15 = arith.mulf %10, %14 : vector<16x32xf32>
    %c0_5 = arith.constant 0 : index
    %c0_6 = arith.constant 0 : index
    %16 = vector.load %arg4[%c0_5, %c0_6] : memref<32x32xf32, #tpu.memory_space<vmem>>, vector<32x32xf32>
    %cst_7 = arith.constant dense<0.000000e+00> : vector<16x32xf32>
    %17 = tpu.matmul %15, %16, %cst_7 {dimension_numbers = #tpu.dot_dimension_numbers<[1], [0], [0], [1], [0, 0, 1, 1], [], []>} : vector<16x32xf32>, vector<32x32xf32>, vector<16x32xf32> -> vector<16x32xf32>
    %c0_8 = arith.constant 0 : index
    %c0_9 = arith.constant 0 : index
    %18 = vector.load %arg7[%c0_8, %c0_9] : memref<1x32xf32, #tpu.memory_space<vmem>>, vector<1x32xf32>
    %19 = vector.shape_cast %18 : vector<1x32xf32> to vector<32xf32>
    %20 = vector.shape_cast %19 : vector<32xf32> to vector<1x32xf32>
    %21 = vector.broadcast %20 : vector<1x32xf32> to vector<16x32xf32>
    %22 = arith.addf %17, %21 : vector<16x32xf32>
    %c0_10 = arith.constant 0 : index
    %c0_11 = arith.constant 0 : index
    %23 = vector.load %arg10[%c0_10, %c0_11] : memref<16x32xf32, #tpu.memory_space<vmem>>, vector<16x32xf32>
    tpu.vector_store %arg10[%c0_10, %c0_11], %22 {strides = array<i32>} : memref<16x32xf32, #tpu.memory_space<vmem>>, vector<16x32xf32>,
    %c0_12 = arith.constant 0 : index
    %c0_13 = arith.constant 0 : index
    %24 = vector.load %arg5[%c0_12, %c0_13] : memref<32x32xf32, #tpu.memory_space<vmem>>, vector<32x32xf32>
    %cst_14 = arith.constant dense<0.000000e+00> : vector<16x32xf32>
    %25 = tpu.matmul %15, %24, %cst_14 {dimension_numbers = #tpu.dot_dimension_numbers<[1], [0], [0], [1], [0, 0, 1, 1], [], []>} : vector<16x32xf32>, vector<32x32xf32>, vector<16x32xf32> -> vector<16x32xf32>
    %c0_15 = arith.constant 0 : index
    %c0_16 = arith.constant 0 : index
    %26 = vector.load %arg8[%c0_15, %c0_16] : memref<1x32xf32, #tpu.memory_space<vmem>>, vector<1x32xf32>
    %27 = vector.shape_cast %26 : vector<1x32xf32> to vector<32xf32>
    %28 = vector.shape_cast %27 : vector<32xf32> to vector<1x32xf32>
    %29 = vector.broadcast %28 : vector<1x32xf32> to vector<16x32xf32>
    %30 = arith.addf %25, %29 : vector<16x32xf32>
    %c0_17 = arith.constant 0 : index
    %c0_18 = arith.constant 0 : index
    %31 = vector.load %arg11[%c0_17, %c0_18] : memref<16x32xf32, #tpu.memory_space<vmem>>, vector<16x32xf32>
    tpu.vector_store %arg11[%c0_17, %c0_18], %30 {strides = array<i32>} : memref<16x32xf32, #tpu.memory_space<vmem>>, vector<16x32xf32>,
    %c0_19 = arith.constant 0 : index
    %c0_20 = arith.constant 0 : index
    %32 = vector.load %arg6[%c0_19, %c0_20] : memref<32x32xf32, #tpu.memory_space<vmem>>, vector<32x32xf32>
    %cst_21 = arith.constant dense<0.000000e+00> : vector<16x32xf32>
    %33 = tpu.matmul %15, %32, %cst_21 {dimension_numbers = #tpu.dot_dimension_numbers<[1], [0], [0], [1], [0, 0, 1, 1], [], []>} : vector<16x32xf32>, vector<32x32xf32>, vector<16x32xf32> -> vector<16x32xf32>
    %c0_22 = arith.constant 0 : index
    %c0_23 = arith.constant 0 : index
    %34 = vector.load %arg9[%c0_22, %c0_23] : memref<1x32xf32, #tpu.memory_space<vmem>>, vector<1x32xf32>
    %35 = vector.shape_cast %34 : vector<1x32xf32> to vector<32xf32>
    %36 = vector.shape_cast %35 : vector<32xf32> to vector<1x32xf32>
    %37 = vector.broadcast %36 : vector<1x32xf32> to vector<16x32xf32>
    %38 = arith.addf %33, %37 : vector<16x32xf32>
    %c0_24 = arith.constant 0 : index
    %c0_25 = arith.constant 0 : index
    %39 = vector.load %arg12[%c0_24, %c0_25] : memref<16x32xf32, #tpu.memory_space<vmem>>, vector<16x32xf32>
    tpu.vector_store %arg12[%c0_24, %c0_25], %38 {strides = array<i32>} : memref<16x32xf32, #tpu.memory_space<vmem>>, vector<16x32xf32>,
    return
  }
  func.func @transform_0(%arg0: i32, %arg1: i32) -> (i32, i32) {
    %c0_i32 = arith.constant 0 : i32
    %c0_i32_0 = arith.constant 0 : i32
    return %arg1, %c0_i32 : i32, i32
  }
  func.func @transform_1(%arg0: i32, %arg1: i32) -> (i32, i32) {
    %c0_i32 = arith.constant 0 : i32
    %c0_i32_0 = arith.constant 0 : i32
    %c0_i32_1 = arith.constant 0 : i32
    return %c0_i32, %c0_i32_0 : i32, i32
  }
  func.func @transform_2(%arg0: i32, %arg1: i32) -> (i32, i32) {
    %c0_i32 = arith.constant 0 : i32
    %c0_i32_0 = arith.constant 0 : i32
    return %c0_i32, %arg0 : i32, i32
  }
  func.func @transform_3(%arg0: i32, %arg1: i32) -> (i32, i32) {
    %c0_i32 = arith.constant 0 : i32
    %c0_i32_0 = arith.constant 0 : i32
    return %c0_i32, %arg0 : i32, i32
  }
  func.func @transform_4(%arg0: i32, %arg1: i32) -> (i32, i32) {
    %c0_i32 = arith.constant 0 : i32
    %c0_i32_0 = arith.constant 0 : i32
    return %c0_i32, %arg0 : i32, i32
  }
  func.func @transform_5(%arg0: i32, %arg1: i32) -> (i32, i32) {
    %c0_i32 = arith.constant 0 : i32
    %c0_i32_0 = arith.constant 0 : i32
    return %c0_i32, %arg0 : i32, i32
  }
  func.func @transform_6(%arg0: i32, %arg1: i32) -> (i32, i32) {
    %c0_i32 = arith.constant 0 : i32
    %c0_i32_0 = arith.constant 0 : i32
    return %c0_i32, %arg0 : i32, i32
  }
  func.func @transform_7(%arg0: i32, %arg1: i32) -> (i32, i32) {
    %c0_i32 = arith.constant 0 : i32
    %c0_i32_0 = arith.constant 0 : i32
    return %c0_i32, %arg0 : i32, i32
  }
  func.func @transform_8(%arg0: i32, %arg1: i32) -> (i32, i32) {
    %c0_i32 = arith.constant 0 : i32
    return %arg1, %arg0 : i32, i32
  }
  func.func @transform_9(%arg0: i32, %arg1: i32) -> (i32, i32) {
    %c0_i32 = arith.constant 0 : i32
    return %arg1, %arg0 : i32, i32
  }
  func.func @transform_10(%arg0: i32, %arg1: i32) -> (i32, i32) {
    %c0_i32 = arith.constant 0 : i32
    return %arg1, %arg0 : i32, i32
  }
}

</mosaic_0001>

<llo_original>
// kernel: tpu_custom_call.1
$region0: #{tpu_custom_call.1}
  #allocation0 [shape = 'u32[]', space=smem, size = 0x4, offset = 0x4, fixed_abs, tag = 'smem constant byte address 0x4 - core index']
  #allocation1 [shape = 'u32[144,128]{1,0:T(1,128)}', space=vmem, size = 0x12000, scoped, tag = 'internal scratch']
  %s0 = inlined_call_operand.hbm [shape: f32[16,32], index: 0, kind: input, shape index: {}]
  %s1 = inlined_call_operand.vmem [shape: f32[1,32], index: 1, kind: input, shape index: {}]
  %s2 = inlined_call_operand.hbm [shape: f32[32,32], index: 2, kind: input, shape index: {}]
  %s3 = inlined_call_operand.hbm [shape: f32[32,32], index: 3, kind: input, shape index: {}]
  %s4 = inlined_call_operand.hbm [shape: f32[32,32], index: 4, kind: input, shape index: {}]
  %s5 = inlined_call_operand.vmem [shape: f32[1,32], index: 5, kind: input, shape index: {}]
  %s6 = inlined_call_operand.vmem [shape: f32[1,32], index: 6, kind: input, shape index: {}]
  %s7 = inlined_call_operand.vmem [shape: f32[1,32], index: 7, kind: input, shape index: {}]
  %s8 = inlined_call_operand.hbm [shape: f32[16,32], index: 8, kind: output, shape index: {0}]
  %s9 = inlined_call_operand.hbm [shape: f32[16,32], index: 9, kind: output, shape index: {1}]
  %s10 = inlined_call_operand.hbm [shape: f32[16,32], index: 10, kind: output, shape index: {2}]
  %11 = xla_tuple %s8, %s9, %s10
  %s12 = sld [smem:[#allocation0]]
  $region74: #{tpu_custom_call.1} parent=0
    _
  %s14 = ssub.s32 1, %s12
  %s15 = scalar_select 0, %s14, %s12
  $region1: #{tpu_custom_call.1} parent=0
    #allocation2 [shape = 'u8[8192]{0}', space=vmem, size = 0x2000, scoped, tag = 'input window, operand 0, single buffered']
    #allocation3 [shape = 's32[1]{0}', space=sflag, size = 0x4, scoped, tag = 'scoped memory for tpu_custom_call.1']
    #allocation4 [shape = 's32[1]{0}', space=sflag, size = 0x4, scoped, tag = 'scoped memory for tpu_custom_call.1']
    #allocation5 [shape = 'u8[16384]{0}', space=vmem, size = 0x4000, scoped, tag = 'input window, operand 2, single buffered']
    #allocation6 [shape = 's32[1]{0}', space=sflag, size = 0x4, scoped, tag = 'scoped memory for tpu_custom_call.1']
    #allocation7 [shape = 'u8[16384]{0}', space=vmem, size = 0x4000, scoped, tag = 'input window, operand 3, single buffered']
    #allocation8 [shape = 'u8[16384]{0}', space=vmem, size = 0x4000, scoped, tag = 'input window, operand 4, single buffered']
    #allocation9 [shape = 's32[1]{0}', space=sflag, size = 0x4, scoped, tag = 'scoped memory for tpu_custom_call.1']
    #allocation10 [shape = 'u8[8192]{0}', space=vmem, size = 0x2000, scoped, tag = 'output window, operand 0, single buffered']
    #allocation11 [shape = 'u8[8192]{0}', space=vmem, size = 0x2000, scoped, tag = 'output window, operand 1, single buffered']
    #allocation12 [shape = 's32[1]{0}', space=sflag, size = 0x4, scoped, tag = 'scoped memory for tpu_custom_call.1']
    #allocation13 [shape = 'u8[8192]{0}', space=vmem, size = 0x2000, scoped, tag = 'output window, operand 2, single buffered']
    %16 = vsyncpa [#allocation3], 0
    %17 = vsyncpa [#allocation6], 0
    %18 = vsyncpa [#allocation9], 0
    %19 = vsyncpa [#allocation4], 0
    %20 = vsyncpa [#allocation12], 0
    // Predicated region
    $region2: #{tpu_custom_call.1} parent=1 // pred_check
      _
    $region3: #{tpu_custom_call.1} parent=1 // pred_check_branch
      %22 = sbr.rel (0) target = $region5
    $region4: #{tpu_custom_call.1} parent=1 // pred_region
      %s24 = ssub.s32 256, 256
      %25 = vsyncadd [#allocation3], %s24
      %s26 = sshll.u32 [#allocation2], 4
      %s27 = int_to_ptr.vmem [resolvable:$true] %s26
      %32 = dma.hbm_to_vmem [thread:$0]  %s0, 256, %s27, [#allocation3], 128, 128, 8
    $region5: #{tpu_custom_call.1} parent=1 // pred_fallthru
      _
    // Predicated region
    $region6: #{tpu_custom_call.1} parent=1 // pred_check
      _
    $region7: #{tpu_custom_call.1} parent=1 // pred_check_branch
      %34 = sbr.rel (0) target = $region9
    $region8: #{tpu_custom_call.1} parent=1 // pred_region
      _
    $region9: #{tpu_custom_call.1} parent=1 // pred_fallthru
      _
    // Predicated region
    $region10: #{tpu_custom_call.1} parent=1 // pred_check
      _
    $region11: #{tpu_custom_call.1} parent=1 // pred_check_branch
      %36 = sbr.rel (0) target = $region13
    $region12: #{tpu_custom_call.1} parent=1 // pred_region
      %s38 = ssub.s32 512, 512
      %39 = vsyncadd [#allocation6], %s38
      %s40 = sshll.u32 [#allocation5], 4
      %s41 = int_to_ptr.vmem [resolvable:$true] %s40
      %46 = dma.hbm_to_vmem [thread:$0]  %s2, 512, %s41, [#allocation6], 128, 128, 8
    $region13: #{tpu_custom_call.1} parent=1 // pred_fallthru
      _
    // Predicated region
    $region14: #{tpu_custom_call.1} parent=1 // pred_check
      _
    $region15: #{tpu_custom_call.1} parent=1 // pred_check_branch
      %48 = sbr.rel (0) target = $region17
    $region16: #{tpu_custom_call.1} parent=1 // pred_region
      %s50 = ssub.s32 512, 512
      %51 = vsyncadd [#allocation6], %s50
      %s52 = sshll.u32 [#allocation7], 4
      %s53 = int_to_ptr.vmem [resolvable:$true] %s52
      %58 = dma.hbm_to_vmem [thread:$0]  %s3, 512, %s53, [#allocation6], 128, 128, 8
    $region17: #{tpu_custom_call.1} parent=1 // pred_fallthru
      _
    // Predicated region
    $region18: #{tpu_custom_call.1} parent=1 // pred_check
      _
    $region19: #{tpu_custom_call.1} parent=1 // pred_check_branch
      %60 = sbr.rel (0) target = $region21
    $region20: #{tpu_custom_call.1} parent=1 // pred_region
      %s62 = ssub.s32 512, 512
      %63 = vsyncadd [#allocation9], %s62
      %s64 = sshll.u32 [#allocation8], 4
      %s65 = int_to_ptr.vmem [resolvable:$true] %s64
      %70 = dma.hbm_to_vmem [thread:$0]  %s4, 512, %s65, [#allocation9], 128, 128, 8
    $region21: #{tpu_custom_call.1} parent=1 // pred_fallthru
      _
    // Predicated region
    $region22: #{tpu_custom_call.1} parent=1 // pred_check
      _
    $region23: #{tpu_custom_call.1} parent=1 // pred_check_branch
      %72 = sbr.rel (0) target = $region25
    $region24: #{tpu_custom_call.1} parent=1 // pred_region
      _
    $region25: #{tpu_custom_call.1} parent=1 // pred_fallthru
      _
    // Predicated region
    $region26: #{tpu_custom_call.1} parent=1 // pred_check
      _
    $region27: #{tpu_custom_call.1} parent=1 // pred_check_branch
      %74 = sbr.rel (0) target = $region29
    $region28: #{tpu_custom_call.1} parent=1 // pred_region
      _
    $region29: #{tpu_custom_call.1} parent=1 // pred_fallthru
      _
    // Predicated region
    $region30: #{tpu_custom_call.1} parent=1 // pred_check
      _
    $region31: #{tpu_custom_call.1} parent=1 // pred_check_branch
      %76 = sbr.rel (0) target = $region33
    $region32: #{tpu_custom_call.1} parent=1 // pred_region
      _
    $region33: #{tpu_custom_call.1} parent=1 // pred_fallthru
      _
    // Predicated region
    $region34: #{tpu_custom_call.1} parent=1 // pred_check
      _
    $region35: #{tpu_custom_call.1} parent=1 // pred_check_branch
      %78 = sbr.rel (0) target = $region37
    $region36: #{tpu_custom_call.1} parent=1 // pred_region
      %79 = dma.done [#allocation3], 256
    $region37: #{tpu_custom_call.1} parent=1 // pred_fallthru
      _
    // Predicated region
    $region38: #{tpu_custom_call.1} parent=1 // pred_check
      _
    $region39: #{tpu_custom_call.1} parent=1 // pred_check_branch
      %81 = sbr.rel (0) target = $region41
    $region40: #{tpu_custom_call.1} parent=1 // pred_region
      %82 = dma.done [#allocation6], 512
    $region41: #{tpu_custom_call.1} parent=1 // pred_fallthru
      _
    // Predicated region
    $region42: #{tpu_custom_call.1} parent=1 // pred_check
      _
    $region43: #{tpu_custom_call.1} parent=1 // pred_check_branch
      %84 = sbr.rel (0) target = $region45
    $region44: #{tpu_custom_call.1} parent=1 // pred_region
      %85 = dma.done [#allocation6], 512
    $region45: #{tpu_custom_call.1} parent=1 // pred_fallthru
      _
    // Predicated region
    $region46: #{tpu_custom_call.1} parent=1 // pred_check
      _
    $region47: #{tpu_custom_call.1} parent=1 // pred_check_branch
      %87 = sbr.rel (0) target = $region49
    $region48: #{tpu_custom_call.1} parent=1 // pred_region
      %88 = dma.done [#allocation9], 512
    $region49: #{tpu_custom_call.1} parent=1 // pred_fallthru
      _
    %v89 = vld [vmem:[#allocation2] sm:$0xff]
    %v90 = vld [vmem:[#allocation2 + $0x8] sm:$0xff]
    %v91 = vmul.f32 %v89, %v89
    %v92 = vmul.f32 %v90, %v90
    %vm93 = vcmask 261120
    %v94 = vsel %vm93, %v91, 0.0
    %95 = vadd.xlane.f32.xlu0 %v94
    %v96 = vpop.xlane.xlu0 %95
    %v97 = vsel %vm93, %v92, 0.0
    %98 = vadd.xlane.f32.xlu0 %v97
    %v99 = vpop.xlane.xlu0 %98
    %v100 = vrcp.pop 32.0
    %v101 = vmul.f32 %v96, %v100
    %v102 = vmul.f32 %v99, %v100
    %v103 = vadd.f32 %v101, 1e-06
    %v104 = vadd.f32 %v102, 1e-06
    %v105 = vrsqrt.pop %v103
    %v106 = vrsqrt.pop %v104
    %v107 = vmul.f32 %v89, %v105
    %v108 = vmul.f32 %v90, %v106
    %v109 = vld [vmem:[%s1] sm:$0x1]
    %v111 = vlaneseq
    %v112 = vshrl.u32 %v111, 7
    %v113 = vsub.s32 0, %v112
    %v114 = vrot.slane %v109, %v113
    %v116 = vmul.f32 %v107, %v114
    %v117 = vmul.f32 %v108, %v114
    %v118 = vld [vmem:[#allocation5] sm:$0xff]
    %v119 = vld [vmem:[#allocation5 + $0x8] sm:$0xff]
    %v120 = vld [vmem:[#allocation5 + $0x10] sm:$0xff]
    %v121 = vld [vmem:[#allocation5 + $0x18] sm:$0xff]
    %v122 = vld [vmem:[%s5] sm:$0x1]
    %v124 = vlaneseq
    %v125 = vshrl.u32 %v124, 7
    %v126 = vsub.s32 0, %v125
    %v127 = vrot.slane %v122, %v126
    %v130 = vsel %vm93, %v116, 0
    %v133 = vsel %vm93, %v117, 0
    %135 = vmatprep.subr.mxu0 0.0
    %136 = vmatpush1.msra.mxu0 %v118
    %137 = vmatprep.subr.mxu0 0.0
    %138 = vmatpush1.msra.mxu0 %v119
    %139 = vmatprep.subr.mxu0 0.0
    %140 = vmatpush1.msra.mxu0 %v120
    %141 = vmatprep.subr.mxu0 0.0
    %142 = vmatpush1.msra.mxu0 %v121
    %143 = vmatprep.subr.mxu0 0.0
    %144 = vmatpush1.msra.mxu0 0.0
    %145 = vmatprep.subr.mxu0 0.0
    %146 = vmatpush1.msra.mxu0 0.0
    %147 = vmatprep.subr.mxu0 0.0
    %148 = vmatpush1.msra.mxu0 0.0
    %149 = vmatprep.subr.mxu0 0.0
    %150 = vmatpush1.msra.mxu0 0.0
    %151 = vmatprep.subr.mxu0 0.0
    %152 = vmatpush1.msra.mxu0 0.0
    %153 = vmatprep.subr.mxu0 0.0
    %154 = vmatpush1.msra.mxu0 0.0
    %155 = vmatprep.subr.mxu0 0.0
    %156 = vmatpush1.msra.mxu0 0.0
    %157 = vmatprep.subr.mxu0 0.0
    %158 = vmatpush1.msra.mxu0 0.0
    %159 = vmatprep.subr.mxu0 0.0
    %160 = vmatpush1.msra.mxu0 0.0
    %161 = vmatprep.subr.mxu0 0.0
    %162 = vmatpush1.msra.mxu0 0.0
    %163 = vmatprep.subr.mxu0 0.0
    %164 = vmatpush1.msra.mxu0 0.0
    %165 = vmatprep.subr.mxu0 0.0
    %166 = vmatpush1.msra.mxu0 0.0
    %167 = vmatprep.subr.mxu0 0.0
    %168 = vmatpush1.msra.mxu0 0.0
    %169 = vmatprep.subr.mxu0 0.0
    %170 = vmatpush1.msra.mxu0 0.0
    %171 = vmatprep.subr.mxu0 0.0
    %172 = vmatpush1.msra.mxu0 0.0
    %173 = vmatprep.subr.mxu0 0.0
    %174 = vmatpush1.msra.mxu0 0.0
    %175 = vmatprep.subr.mxu0 0.0
    %176 = vmatpush1.msra.mxu0 0.0
    %177 = vmatprep.subr.mxu0 0.0
    %178 = vmatpush1.msra.mxu0 0.0
    %179 = vmatprep.subr.mxu0 0.0
    %180 = vmatpush1.msra.mxu0 0.0
    %181 = vmatprep.subr.mxu0 0.0
    %182 = vmatpush1.msra.mxu0 0.0
    %183 = vmatprep.subr.mxu0 0.0
    %184 = vmatpush1.msra.mxu0 0.0
    %185 = vmatprep.subr.mxu0 0.0
    %186 = vmatpush1.msra.mxu0 0.0
    %187 = vmatprep.subr.mxu0 0.0
    %188 = vmatpush1.msra.mxu0 0.0
    %189 = vmatprep.subr.mxu0 0.0
    %190 = vmatpush1.msra.mxu0 0.0
    %191 = vmatprep.subr.mxu0 0.0
    %192 = vmatpush1.msra.mxu0 0.0
    %193 = vmatprep.subr.mxu0 0.0
    %194 = vmatpush1.msra.mxu0 0.0
    %195 = vmatprep.subr.mxu0 0.0
    %196 = vmatpush1.msra.mxu0 0.0
    %197 = vmatprep.subr.mxu0 0.0
    %198 = vmatpush1.msra.mxu0 0.0
    %199 = vmatprep.mubr.f32.mxu0 0.0
    %200 = vmatmul.mubr.f32.gmra.mrb[0].mxu0 %v130
    %v201 = vpop.f32.mrb[0].mxu0
    %v202 = vadd.f32 %v127, %v201
    %v203 = vpop.f32.mrb[0].mxu0
    %204 = vmatprep.mubr.f32.mxu0 0.0
    %205 = vmatmul.mubr.f32.gmra.mrb[0].mxu0 %v133
    %v206 = vpop.f32.mrb[0].mxu0
    %v207 = vadd.f32 %v127, %v206
    %v208 = vpop.f32.mrb[0].mxu0
    %209 = vdwg.mxu0
    %210 = vst.msk [vmem:[#allocation10] sm:$0xff] %vm93, %v202
    %211 = vst.msk [vmem:[#allocation10 + $0x8] sm:$0xff] %vm93, %v207
    %v212 = vld [vmem:[#allocation7] sm:$0xff]
    %v213 = vld [vmem:[#allocation7 + $0x8] sm:$0xff]
    %v214 = vld [vmem:[#allocation7 + $0x10] sm:$0xff]
    %v215 = vld [vmem:[#allocation7 + $0x18] sm:$0xff]
    %v216 = vld [vmem:[%s6] sm:$0x1]
    %v218 = vlaneseq
    %v219 = vshrl.u32 %v218, 7
    %v220 = vsub.s32 0, %v219
    %v221 = vrot.slane %v216, %v220
    %223 = vmatprep.subr.mxu0 0.0
    %224 = vmatpush1.msra.mxu0 %v212
    %225 = vmatprep.subr.mxu0 0.0
    %226 = vmatpush1.msra.mxu0 %v213
    %227 = vmatprep.subr.mxu0 0.0
    %228 = vmatpush1.msra.mxu0 %v214
    %229 = vmatprep.subr.mxu0 0.0
    %230 = vmatpush1.msra.mxu0 %v215
    %231 = vmatprep.subr.mxu0 0.0
    %232 = vmatpush1.msra.mxu0 0.0
    %233 = vmatprep.subr.mxu0 0.0
    %234 = vmatpush1.msra.mxu0 0.0
    %235 = vmatprep.subr.mxu0 0.0
    %236 = vmatpush1.msra.mxu0 0.0
    %237 = vmatprep.subr.mxu0 0.0
    %238 = vmatpush1.msra.mxu0 0.0
    %239 = vmatprep.subr.mxu0 0.0
    %240 = vmatpush1.msra.mxu0 0.0
    %241 = vmatprep.subr.mxu0 0.0
    %242 = vmatpush1.msra.mxu0 0.0
    %243 = vmatprep.subr.mxu0 0.0
    %244 = vmatpush1.msra.mxu0 0.0
    %245 = vmatprep.subr.mxu0 0.0
    %246 = vmatpush1.msra.mxu0 0.0
    %247 = vmatprep.subr.mxu0 0.0
    %248 = vmatpush1.msra.mxu0 0.0
    %249 = vmatprep.subr.mxu0 0.0
    %250 = vmatpush1.msra.mxu0 0.0
    %251 = vmatprep.subr.mxu0 0.0
    %252 = vmatpush1.msra.mxu0 0.0
    %253 = vmatprep.subr.mxu0 0.0
    %254 = vmatpush1.msra.mxu0 0.0
    %255 = vmatprep.subr.mxu0 0.0
    %256 = vmatpush1.msra.mxu0 0.0
    %257 = vmatprep.subr.mxu0 0.0
    %258 = vmatpush1.msra.mxu0 0.0
    %259 = vmatprep.subr.mxu0 0.0
    %260 = vmatpush1.msra.mxu0 0.0
    %261 = vmatprep.subr.mxu0 0.0
    %262 = vmatpush1.msra.mxu0 0.0
    %263 = vmatprep.subr.mxu0 0.0
    %264 = vmatpush1.msra.mxu0 0.0
    %265 = vmatprep.subr.mxu0 0.0
    %266 = vmatpush1.msra.mxu0 0.0
    %267 = vmatprep.subr.mxu0 0.0
    %268 = vmatpush1.msra.mxu0 0.0
    %269 = vmatprep.subr.mxu0 0.0
    %270 = vmatpush1.msra.mxu0 0.0
    %271 = vmatprep.subr.mxu0 0.0
    %272 = vmatpush1.msra.mxu0 0.0
    %273 = vmatprep.subr.mxu0 0.0
    %274 = vmatpush1.msra.mxu0 0.0
    %275 = vmatprep.subr.mxu0 0.0
    %276 = vmatpush1.msra.mxu0 0.0
    %277 = vmatprep.subr.mxu0 0.0
    %278 = vmatpush1.msra.mxu0 0.0
    %279 = vmatprep.subr.mxu0 0.0
    %280 = vmatpush1.msra.mxu0 0.0
    %281 = vmatprep.subr.mxu0 0.0
    %282 = vmatpush1.msra.mxu0 0.0
    %283 = vmatprep.subr.mxu0 0.0
    %284 = vmatpush1.msra.mxu0 0.0
    %285 = vmatprep.subr.mxu0 0.0
    %286 = vmatpush1.msra.mxu0 0.0
    %287 = vmatprep.mubr.f32.mxu0 0.0
    %288 = vmatmul.mubr.f32.gmra.mrb[0].mxu0 %v130
    %v289 = vpop.f32.mrb[0].mxu0
    %v290 = vadd.f32 %v221, %v289
    %v291 = vpop.f32.mrb[0].mxu0
    %292 = vmatprep.mubr.f32.mxu0 0.0
    %293 = vmatmul.mubr.f32.gmra.mrb[0].mxu0 %v133
    %v294 = vpop.f32.mrb[0].mxu0
    %v295 = vadd.f32 %v221, %v294
    %v296 = vpop.f32.mrb[0].mxu0
    %297 = vdwg.mxu0
    %298 = vst.msk [vmem:[#allocation11] sm:$0xff] %vm93, %v290
    %299 = vst.msk [vmem:[#allocation11 + $0x8] sm:$0xff] %vm93, %v295
    %v300 = vld [vmem:[#allocation8] sm:$0xff]
    %v301 = vld [vmem:[#allocation8 + $0x8] sm:$0xff]
    %v302 = vld [vmem:[#allocation8 + $0x10] sm:$0xff]
    %v303 = vld [vmem:[#allocation8 + $0x18] sm:$0xff]
    %v304 = vld [vmem:[%s7] sm:$0x1]
    %v306 = vlaneseq
    %v307 = vshrl.u32 %v306, 7
    %v308 = vsub.s32 0, %v307
    %v309 = vrot.slane %v304, %v308
    %311 = vmatprep.subr.mxu0 0.0
    %312 = vmatpush1.msra.mxu0 %v300
    %313 = vmatprep.subr.mxu0 0.0
    %314 = vmatpush1.msra.mxu0 %v301
    %315 = vmatprep.subr.mxu0 0.0
    %316 = vmatpush1.msra.mxu0 %v302
    %317 = vmatprep.subr.mxu0 0.0
    %318 = vmatpush1.msra.mxu0 %v303
    %319 = vmatprep.subr.mxu0 0.0
    %320 = vmatpush1.msra.mxu0 0.0
    %321 = vmatprep.subr.mxu0 0.0
    %322 = vmatpush1.msra.mxu0 0.0
    %323 = vmatprep.subr.mxu0 0.0
    %324 = vmatpush1.msra.mxu0 0.0
    %325 = vmatprep.subr.mxu0 0.0
    %326 = vmatpush1.msra.mxu0 0.0
    %327 = vmatprep.subr.mxu0 0.0
    %328 = vmatpush1.msra.mxu0 0.0
    %329 = vmatprep.subr.mxu0 0.0
    %330 = vmatpush1.msra.mxu0 0.0
    %331 = vmatprep.subr.mxu0 0.0
    %332 = vmatpush1.msra.mxu0 0.0
    %333 = vmatprep.subr.mxu0 0.0
    %334 = vmatpush1.msra.mxu0 0.0
    %335 = vmatprep.subr.mxu0 0.0
    %336 = vmatpush1.msra.mxu0 0.0
    %337 = vmatprep.subr.mxu0 0.0
    %338 = vmatpush1.msra.mxu0 0.0
    %339 = vmatprep.subr.mxu0 0.0
    %340 = vmatpush1.msra.mxu0 0.0
    %341 = vmatprep.subr.mxu0 0.0
    %342 = vmatpush1.msra.mxu0 0.0
    %343 = vmatprep.subr.mxu0 0.0
    %344 = vmatpush1.msra.mxu0 0.0
    %345 = vmatprep.subr.mxu0 0.0
    %346 = vmatpush1.msra.mxu0 0.0
    %347 = vmatprep.subr.mxu0 0.0
    %348 = vmatpush1.msra.mxu0 0.0
    %349 = vmatprep.subr.mxu0 0.0
    %350 = vmatpush1.msra.mxu0 0.0
    %351 = vmatprep.subr.mxu0 0.0
    %352 = vmatpush1.msra.mxu0 0.0
    %353 = vmatprep.subr.mxu0 0.0
    %354 = vmatpush1.msra.mxu0 0.0
    %355 = vmatprep.subr.mxu0 0.0
    %356 = vmatpush1.msra.mxu0 0.0
    %357 = vmatprep.subr.mxu0 0.0
    %358 = vmatpush1.msra.mxu0 0.0
    %359 = vmatprep.subr.mxu0 0.0
    %360 = vmatpush1.msra.mxu0 0.0
    %361 = vmatprep.subr.mxu0 0.0
    %362 = vmatpush1.msra.mxu0 0.0
    %363 = vmatprep.subr.mxu0 0.0
    %364 = vmatpush1.msra.mxu0 0.0
    %365 = vmatprep.subr.mxu0 0.0
    %366 = vmatpush1.msra.mxu0 0.0
    %367 = vmatprep.subr.mxu0 0.0
    %368 = vmatpush1.msra.mxu0 0.0
    %369 = vmatprep.subr.mxu0 0.0
    %370 = vmatpush1.msra.mxu0 0.0
    %371 = vmatprep.subr.mxu0 0.0
    %372 = vmatpush1.msra.mxu0 0.0
    %373 = vmatprep.subr.mxu0 0.0
    %374 = vmatpush1.msra.mxu0 0.0
    %375 = vmatprep.mubr.f32.mxu0 0.0
    %376 = vmatmul.mubr.f32.gmra.mrb[0].mxu0 %v130
    %v377 = vpop.f32.mrb[0].mxu0
    %v378 = vadd.f32 %v309, %v377
    %v379 = vpop.f32.mrb[0].mxu0
    %380 = vmatprep.mubr.f32.mxu0 0.0
    %381 = vmatmul.mubr.f32.gmra.mrb[0].mxu0 %v133
    %v382 = vpop.f32.mrb[0].mxu0
    %v383 = vadd.f32 %v309, %v382
    %v384 = vpop.f32.mrb[0].mxu0
    %385 = vdwg.mxu0
    %386 = vst.msk [vmem:[#allocation13] sm:$0xff] %vm93, %v378
    %387 = vst.msk [vmem:[#allocation13 + $0x8] sm:$0xff] %vm93, %v383
    // Predicated region
    $region50: #{tpu_custom_call.1} parent=1 // pred_check
      _
    $region51: #{tpu_custom_call.1} parent=1 // pred_check_branch
      %389 = sbr.rel (0) target = $region53
    $region52: #{tpu_custom_call.1} parent=1 // pred_region
      %s391 = ssub.s32 256, 256
      %392 = vsyncadd [#allocation4], %s391
      %s393 = sshll.u32 [#allocation10], 4
      %s394 = int_to_ptr.vmem [resolvable:$true] %s393
      %399 = dma.vmem_to_hbm [thread:$0]  %s394, 256, %s8, [#allocation4], 128, 128, 8
    $region53: #{tpu_custom_call.1} parent=1 // pred_fallthru
      _
    // Predicated region
    $region54: #{tpu_custom_call.1} parent=1 // pred_check
      _
    $region55: #{tpu_custom_call.1} parent=1 // pred_check_branch
      %401 = sbr.rel (0) target = $region57
    $region56: #{tpu_custom_call.1} parent=1 // pred_region
      %s403 = ssub.s32 256, 256
      %404 = vsyncadd [#allocation12], %s403
      %s405 = sshll.u32 [#allocation11], 4
      %s406 = int_to_ptr.vmem [resolvable:$true] %s405
      %411 = dma.vmem_to_hbm [thread:$0]  %s406, 256, %s9, [#allocation12], 128, 128, 8
    $region57: #{tpu_custom_call.1} parent=1 // pred_fallthru
      _
    // Predicated region
    $region58: #{tpu_custom_call.1} parent=1 // pred_check
      _
    $region59: #{tpu_custom_call.1} parent=1 // pred_check_branch
      %413 = sbr.rel (0) target = $region61
    $region60: #{tpu_custom_call.1} parent=1 // pred_region
      %s415 = ssub.s32 256, 256
      %416 = vsyncadd [#allocation12], %s415
      %s417 = sshll.u32 [#allocation13], 4
      %s418 = int_to_ptr.vmem [resolvable:$true] %s417
      %423 = dma.vmem_to_hbm [thread:$0]  %s418, 256, %s10, [#allocation12], 128, 128, 8
    $region61: #{tpu_custom_call.1} parent=1 // pred_fallthru
      _
    // Predicated region
    $region62: #{tpu_custom_call.1} parent=1 // pred_check
      _
    $region63: #{tpu_custom_call.1} parent=1 // pred_check_branch
      %425 = sbr.rel (0) target = $region65
    $region64: #{tpu_custom_call.1} parent=1 // pred_region
      %426 = dma.done [#allocation4], 256
    $region65: #{tpu_custom_call.1} parent=1 // pred_fallthru
      _
    // Predicated region
    $region66: #{tpu_custom_call.1} parent=1 // pred_check
      _
    $region67: #{tpu_custom_call.1} parent=1 // pred_check_branch
      %428 = sbr.rel (0) target = $region69
    $region68: #{tpu_custom_call.1} parent=1 // pred_region
      %429 = dma.done [#allocation12], 256
    $region69: #{tpu_custom_call.1} parent=1 // pred_fallthru
      _
    // Predicated region
    $region70: #{tpu_custom_call.1} parent=1 // pred_check
      _
    $region71: #{tpu_custom_call.1} parent=1 // pred_check_branch
      %431 = sbr.rel (0) target = $region73
    $region72: #{tpu_custom_call.1} parent=1 // pred_region
      %432 = dma.done [#allocation12], 256
    $region73: #{tpu_custom_call.1} parent=1 // pred_fallthru
      _
    %433 = vsyncpa [#allocation3], 1
    %434 = vsyncpa [#allocation6], 1
    %435 = vsyncpa [#allocation9], 1
    %436 = vsyncpa [#allocation4], 1
    %437 = vsyncpa [#allocation12], 1

</llo_original>
